<compile_context>
chip_gen: v5e
topology: v5e:2x2
jax: 0.10.0
libtpu: 0.0.40
codegen_flags: <defaults>
</compile_context>

<pallas_src>
import functools

import jax
import jax.numpy as jnp
from jax.experimental import pallas as pl
from jax.experimental.pallas import tpu as pltpu

# Fixed 3x3 curvature filter from the module's __init__ (used by the reference).
_W3 = [[-1.0 / 16.0, 5.0 / 16.0, -1.0 / 16.0],
       [ 5.0 / 16.0,      -1.0,   5.0 / 16.0],
       [-1.0 / 16.0, 5.0 / 16.0, -1.0 / 16.0]]

_LANES = 128
_SUBLANES = 8


def _tpu_vmem_bytes():
    """Physical VMEM per TensorCore; conservative fallback if unavailable."""
    try:
        info = pltpu.get_tpu_info()
        v = int(getattr(info, "vmem_capacity_bytes", 0) or 0)
        if v > 0:
            return v
    except Exception:
        pass
    return 64 * 1024 * 1024            # v7x-sized fallback (smallest current part)


def _choose_c_tile(C, HWp, block_budget_bytes, min_blocks):
    """Largest channel tile (multiple of 8, or the full C) whose f32 block fits
    the budget, with >= min_blocks channel blocks when achievable."""
    bytes_per_c = HWp * 4
    c_tile = max(1, block_budget_bytes // bytes_per_c)
    if min_blocks > 1:
        c_tile = min(c_tile, pl.cdiv(C, min_blocks))
    if c_tile >= C:
        return C
    # TODO(synk): for very large H*W (>~512x512 f32) also tile the flattened
    # spatial axis (needs a +-(W+1) halo per block); until then the channel
    # tile floors at 8 and can exceed the VMEM budget for huge images.
    return max(_SUBLANES, (c_tile // _SUBLANES) * _SUBLANES)


def _score_kernel(x_ref, mask_ref, p_ref, *, W, HWp):
    """x_ref: (1, c_tile, HWp); mask_ref: (HWp, 1); p_ref: (1, c_tile, 1).

    p[c] = sum_f mask[f] * | sum_o w(o) * x[c, f + o] |
    i.e. the abs-sum over the valid 3x3 curvature conv, anchored at the center
    tap.  Wrapped / padded taps only reach masked-out positions.
    """
    # TODO(synk): for bf16 activations on v6e/v7x the tap sums could stay in
    # bf16 (halves vreg footprint, doubles elements per roll); inputs here are
    # f32 so everything runs in f32.
    x = x_ref[0].astype(jnp.float32)                  # (c_tile, HWp)

    def tap(arr, off):
        # tap(arr, off)[..., f] == arr[..., (f + off) % HWp]
        shift = (-off) % HWp
        if shift == 0:
            return arr
        return pltpu.roll(arr, shift=shift, axis=1)   # XLU lane rotation

    # Separable 3x3 decomposition: 6 rolls instead of 8.
    rs = x + tap(x, -1) + tap(x, 1)                   # 3-wide row sum
    vert = tap(x, -W) + tap(x, W)                     # vertical neighbours
    s9 = rs + tap(rs, -W) + tap(rs, W)                # full 3x3 box sum
    e4 = (rs - x) + vert                              # the 4 edge taps
    # acc = -1/16 * corners + 5/16 * edges - 1 * center
    acc = (6.0 / 16.0) * e4 - (1.0 / 16.0) * s9 - (15.0 / 16.0) * x

    # Masked spatial reduction as a matvec on the (otherwise idle) MXU.
    res = jnp.dot(jnp.abs(acc), mask_ref[...],
                  preferred_element_type=jnp.float32)  # (c_tile, 1)
    p_ref[...] = res[None, :, :]


def cnn_qulv_scores(x):
    """Pallas call computing the (B, C) curvature scores."""
    B, C, H, W = x.shape
    if H < 3 or W < 3:
        raise ValueError("CNN_qulv needs H >= 3 and W >= 3 for the 3x3 valid conv.")
    HW = H * W
    HWp = pl.cdiv(HW, _LANES) * _LANES       # lane-aligned flattened spatial dim

    vmem_bytes = _tpu_vmem_bytes()
    block_budget = vmem_bytes // 16          # ~8 MiB on v5e/v6e, ~4 MiB on v7x
    min_blocks = 2 if B == 1 else 1          # keep both v7x TensorCores busy
    c_tile = _choose_c_tile(C, HWp, block_budget, min_blocks)
    n_ct = pl.cdiv(C, c_tile)
    Cp = n_ct * c_tile

    # Flatten spatial (free for contiguous NCHW); zero-pad lanes + channels.
    # Padded channels score 0 and are sliced off afterwards.
    xf = x.reshape(B, C, HW)
    if HWp != HW or Cp != C:
        xf = jnp.pad(xf, ((0, 0), (0, Cp - C), (0, HWp - HW)))

    # Interior mask for the center-anchored valid conv (rows/cols in
    # [1, dim-2]); also zeroes the lane padding.  Shaped (HWp, 1) so the
    # in-kernel masked reduction is a single MXU matvec.
    r = jnp.arange(H)
    c = jnp.arange(W)
    m2 = (((r >= 1) & (r <= H - 2))[:, None]
          & ((c >= 1) & (c <= W - 2))[None, :])
    mask = m2.astype(jnp.float32).reshape(HW)
    mask = jnp.pad(mask, (0, HWp - HW)).reshape(HWp, 1)

    block_bytes = c_tile * HWp * 4
    # Double-buffered input + ~6 live block-sized f32 temps + slack, capped at
    # ~3/4 of physical VMEM (~96 MiB on v5e/v6e, ~48 MiB on v7x).
    vmem_limit = int(min(max(32 * 1024 * 1024, 8 * block_bytes + (2 << 20)),
                         (vmem_bytes * 3) // 4))

    kernel = functools.partial(_score_kernel, W=W, HWp=HWp)
    p = pl.pallas_call(
        kernel,
        out_shape=jax.ShapeDtypeStruct((B, Cp, 1), jnp.float32),
        grid=(B, n_ct),
        in_specs=[
            pl.BlockSpec((1, c_tile, HWp), lambda b, ct: (b, ct, 0)),
            pl.BlockSpec((HWp, 1), lambda b, ct: (0, 0)),      # constant block
        ],
        out_specs=pl.BlockSpec((1, c_tile, 1), lambda b, ct: (b, ct, 0)),
        compiler_params=pltpu.CompilerParams(
            dimension_semantics=("parallel", "parallel"),
            vmem_limit_bytes=vmem_limit,
        ),
    )(xf, mask)
    return p[:, :C, 0]


def cnn_qulv(x, ratio):
    """Full forward: scores (Pallas) -> top-k channels -> gather (JAX glue)."""
    B, C, H, W = x.shape
    p = cnn_qulv_scores(x)                              # (B, C)
    k = int(ratio * C)                                  # may be 0, as in PyTorch
    _, idx = jax.lax.top_k(p, k)                        # (B, k), descending
    selected = jax.vmap(lambda xi, ii: xi[ii])(x, idx)  # per-batch index_select
    return selected


def _reference_scores(x):
    """Pure-JAX elementwise reference for the per-channel curvature scores."""
    B, C, H, W = x.shape
    x32 = x.astype(jnp.float32)
    Ho, Wo = H - 2, W - 2
    acc = jnp.zeros((B, C, Ho, Wo), jnp.float32)
    for dy in range(3):
        for dx in range(3):
            acc = acc + _W3[dy][dx] * x32[:, :, dy:dy + Ho, dx:dx + Wo]
    return jnp.sum(jnp.abs(acc), axis=(2, 3))           # (B, C)


def _reference(x, ratio):
    """Pure-JAX reference mirroring the PyTorch forward."""
    B, C, H, W = x.shape
    p = _reference_scores(x)
    k = int(ratio * C)
    _, idx = jax.lax.top_k(p, k)
    return jax.vmap(lambda xi, ii: xi[ii])(x, idx)


if __name__ == "__main__":
    key = jax.random.PRNGKey(0)
    B, C, H, W = 2, 4, 16, 16
    x = jax.random.normal(key, (B, C, H, W), dtype=jnp.float32)
    ratio = 0.5

    out = cnn_qulv(x, ratio)
    out = jax.block_until_ready(out)

    # Check the raw scores against a pure-JAX reference.
    p_kernel = cnn_qulv_scores(x)
    p_ref = _reference_scores(x)
    assert jnp.allclose(p_kernel, p_ref, atol=1e-3, rtol=1e-4), "score mismatch"

    # Check the full forward (top-k channel gather).
    ref = _reference(x, ratio)
    assert out.shape == (B, int(ratio * C), H, W), out.shape
    assert jnp.allclose(out, ref, atol=1e-5, rtol=1e-5), "mismatch vs reference"

    print("KERNEL_OK")
</pallas_src>

<mosaic_0001>
module attributes {stable_mosaic.version = 11 : i64} {
  func.func @_score_kernel(%arg0: i32, %arg1: i32, %arg2: memref<1x4x256xf32, #tpu.memory_space<vmem>>, %arg3: memref<256x1xf32, #tpu.memory_space<vmem>>, %arg4: memref<1x4x1xf32, #tpu.memory_space<vmem>>) attributes {dimension_semantics = [#tpu.dimension_semantics<parallel>, #tpu.dimension_semantics<parallel>], iteration_bounds = array<i64: 2, 1>, scalar_prefetch = 0 : i64, scratch_operands = 0 : i64, tpu.core_type = #tpu.core_type<tc>, window_params = [{transform_indices = @transform_0, window_bounds = array<i64: 1, 4, 256>}, {pipeline_mode = #tpu.pipeline_mode<synchronous>, transform_indices = @transform_1, window_bounds = array<i64: 256, 1>}, {transform_indices = @transform_2, window_bounds = array<i64: 1, 4, 1>}]} {
    %c0 = arith.constant 0 : index
    %c0_0 = arith.constant 0 : index
    %c0_1 = arith.constant 0 : index
    %0 = vector.load %arg2[%c0, %c0_0, %c0_1] : memref<1x4x256xf32, #tpu.memory_space<vmem>>, vector<1x4x256xf32>
    %1 = vector.shape_cast %0 : vector<1x4x256xf32> to vector<4x256xf32>
    %c1_i32 = arith.constant 1 : i32
    %2 = tpu.dynamic_rotate %1 by %c1_i32 dim 1 : vector<4x256xf32>, i32 -> vector<4x256xf32>
    %3 = arith.addf %1, %2 : vector<4x256xf32>
    %c255_i32 = arith.constant 255 : i32
    %4 = tpu.dynamic_rotate %1 by %c255_i32 dim 1 : vector<4x256xf32>, i32 -> vector<4x256xf32>
    %5 = arith.addf %3, %4 : vector<4x256xf32>
    %c16_i32 = arith.constant 16 : i32
    %6 = tpu.dynamic_rotate %1 by %c16_i32 dim 1 : vector<4x256xf32>, i32 -> vector<4x256xf32>
    %c240_i32 = arith.constant 240 : i32
    %7 = tpu.dynamic_rotate %1 by %c240_i32 dim 1 : vector<4x256xf32>, i32 -> vector<4x256xf32>
    %8 = arith.addf %6, %7 : vector<4x256xf32>
    %c16_i32_2 = arith.constant 16 : i32
    %9 = tpu.dynamic_rotate %5 by %c16_i32_2 dim 1 : vector<4x256xf32>, i32 -> vector<4x256xf32>
    %10 = arith.addf %5, %9 : vector<4x256xf32>
    %c240_i32_3 = arith.constant 240 : i32
    %11 = tpu.dynamic_rotate %5 by %c240_i32_3 dim 1 : vector<4x256xf32>, i32 -> vector<4x256xf32>
    %12 = arith.addf %10, %11 : vector<4x256xf32>
    %13 = arith.subf %5, %1 : vector<4x256xf32>
    %14 = arith.addf %13, %8 : vector<4x256xf32>
    %cst = arith.constant 3.750000e-01 : f32
    %15 = vector.broadcast %cst : f32 to vector<4x256xf32>
    %16 = arith.mulf %15, %14 : vector<4x256xf32>
    %cst_4 = arith.constant 6.250000e-02 : f32
    %17 = vector.broadcast %cst_4 : f32 to vector<4x256xf32>
    %18 = arith.mulf %17, %12 : vector<4x256xf32>
    %19 = arith.subf %16, %18 : vector<4x256xf32>
    %cst_5 = arith.constant 9.375000e-01 : f32
    %20 = vector.broadcast %cst_5 : f32 to vector<4x256xf32>
    %21 = arith.mulf %20, %1 : vector<4x256xf32>
    %22 = arith.subf %19, %21 : vector<4x256xf32>
    %23 = math.absf %22 : vector<4x256xf32>
    %c0_6 = arith.constant 0 : index
    %c0_7 = arith.constant 0 : index
    %24 = vector.load %arg3[%c0_6, %c0_7] : memref<256x1xf32, #tpu.memory_space<vmem>>, vector<256x1xf32>
    %cst_8 = arith.constant dense<0.000000e+00> : vector<4x1xf32>
    %25 = tpu.matmul %23, %24, %cst_8 {dimension_numbers = #tpu.dot_dimension_numbers<[1], [0], [0], [1], [0, 0, 1, 1], [], []>} : vector<4x256xf32>, vector<256x1xf32>, vector<4x1xf32> -> vector<4x1xf32>
    %26 = vector.shape_cast %25 : vector<4x1xf32> to vector<1x4x1xf32>
    %c0_9 = arith.constant 0 : index
    %c0_10 = arith.constant 0 : index
    %c0_11 = arith.constant 0 : index
    %27 = vector.load %arg4[%c0_9, %c0_10, %c0_11] : memref<1x4x1xf32, #tpu.memory_space<vmem>>, vector<1x4x1xf32>
    tpu.vector_store %arg4[%c0_9, %c0_10, %c0_11], %26 {strides = array<i32>} : memref<1x4x1xf32, #tpu.memory_space<vmem>>, vector<1x4x1xf32>,
    return
  }
  func.func @transform_0(%arg0: i32, %arg1: i32) -> (i32, i32, i32) {
    %c0_i32 = arith.constant 0 : i32
    %c0_i32_0 = arith.constant 0 : i32
    return %arg0, %arg1, %c0_i32 : i32, i32, i32
  }
  func.func @transform_1(%arg0: i32, %arg1: i32) -> (i32, i32) {
    %c0_i32 = arith.constant 0 : i32
    %c0_i32_0 = arith.constant 0 : i32
    %c0_i32_1 = arith.constant 0 : i32
    return %c0_i32, %c0_i32_0 : i32, i32
  }
  func.func @transform_2(%arg0: i32, %arg1: i32) -> (i32, i32, i32) {
    %c0_i32 = arith.constant 0 : i32
    %c0_i32_0 = arith.constant 0 : i32
    return %arg0, %arg1, %c0_i32 : i32, i32, i32
  }
}

</mosaic_0001>

<llo_original>
// kernel: tpu_custom_call.1
$region0: #{tpu_custom_call.1}
  #allocation0 [shape = 'u32[]', space=smem, size = 0x4, offset = 0x4, fixed_abs, tag = 'smem constant byte address 0x4 - core index']
  #allocation1 [shape = 'u32[72,128]{1,0:T(1,128)}', space=vmem, size = 0x9000, scoped, tag = 'internal scratch']
  %s0 = inlined_call_operand.vmem [shape: f32[2,4,256], index: 0, kind: input, shape index: {}]
  %s1 = inlined_call_operand.vmem [shape: f32[256,1], index: 1, kind: input, shape index: {}]
  %s2 = inlined_call_operand.vmem [shape: f32[2,4,1], index: 2, kind: output, shape index: {}]
  %s3 = sld [smem:[#allocation0]]
  $region41: #{tpu_custom_call.1} parent=0
    _
  %s5 = ssub.s32 1, %s3
  %s6 = scalar_select 0, %s5, %s3
  loop: start=0, step=1, limit=4
  $region2: #{tpu_custom_call.1} parent=0 // loop_pre_header
    _
  $region3: #{tpu_custom_call.1} parent=0 // loop_header
    %s8 = sphi 0, %s12
    %p9 = scmp.ge.s32.totalorder %s8, 4
    %s15 = sphi 0, %s27
    %s16 = sphi 0, %s23
    %s17 = sphi 0, %s15
    %s18 = sphi 0, %s16
    %s19 = sphi 0, %s17
    %s20 = sphi 0, %s18
    %s32 = sphi 0, %s34
    %s35 = sphi 0, %s32
    %s36 = sphi 0, %s35
    %s52 = sphi 0, %s36
    %s56 = sphi 0, %s56
    %s58 = sphi 0, %s56
    %s59 = sphi 0, %s58
    %s73 = sphi 0, %s59
    %s81 = sphi 0, %s83
    %s84 = sphi 0, %s81
    %s85 = sphi 0, %s84
    %s101 = sphi 0, %s85
  $region4: #{tpu_custom_call.1} parent=0 // loop_header_branch
    %11 = sbr.rel (%p9) target = $region8
  $region5: #{tpu_custom_call.1} parent=0 // loop_body
    %s13 = ssub.s32 %s8, 1
    %s14 = ssub.s32 %s8, 2
    %s21 = sadd.s32 1, %s16
    %p22 = scmp.ge.s32.totalorder %s21, 1
    %s23 = scalar_select %p22, 0, %s21
    %s24 = sadd.s32 1, %s15
    %s25 = scalar_select %p22, %s24, %s15
    %p26 = scmp.ge.s32.totalorder %s25, 2
    %s27 = scalar_select %p26, 0, %s25
    %s28 = ssub.s32 %s15, %s27
    %s29 = ssub.s32 %s16, %s23
    %s30 = sor.u32 %s28, %s29
    %p31 = scmp.eq.s32.totalorder %s30, 0
    %s33 = sadd.s32 %s32, 1
    %s34 = scalar_select %p31, %s32, %s33
    %p37 = pneg %p31
    %p38 = scmp.eq.s32.totalorder %s8, 1
    %p39 = por %p37, %p38
    %p40 = scmp.ne.s32.totalorder %s32, %s35
    %p41 = scmp.eq.s32.totalorder %s8, 0
    %p42 = por %p40, %p41
    %p43 = scmp.ne.s32.totalorder %s32, %s35
    %p44 = scmp.eq.s32.totalorder %s13, 1
    %p45 = por %p43, %p44
    %p46 = scmp.ne.s32.totalorder %s35, %s36
    %p47 = scmp.eq.s32.totalorder %s13, 0
    %p48 = por %p46, %p47
    %p49 = scmp.ne.s32.totalorder %s35, %s36
    %p50 = scmp.eq.s32.totalorder %s14, 1
    %p51 = por %p49, %p50
    %p53 = scmp.ne.s32.totalorder %s36, %s52
    %p54 = scmp.eq.s32.totalorder %s14, 0
    %p55 = por %p53, %p54
    %s57 = sadd.s32 %s56, 1
    %p60 = scmp.eq.s32.totalorder %s8, 1
    %p61 = scmp.ne.s32.totalorder %s56, %s58
    %p62 = scmp.eq.s32.totalorder %s8, 0
    %p63 = por %p61, %p62
    %p64 = scmp.ne.s32.totalorder %s56, %s58
    %p65 = scmp.eq.s32.totalorder %s13, 1
    %p66 = por %p64, %p65
    %p67 = scmp.ne.s32.totalorder %s58, %s59
    %p68 = scmp.eq.s32.totalorder %s13, 0
    %p69 = por %p67, %p68
    %p70 = scmp.ne.s32.totalorder %s58, %s59
    %p71 = scmp.eq.s32.totalorder %s14, 1
    %p72 = por %p70, %p71
    %p74 = scmp.ne.s32.totalorder %s59, %s73
    %p75 = scmp.eq.s32.totalorder %s14, 0
    %p76 = por %p74, %p75
    %s77 = ssub.s32 %s15, %s27
    %s78 = ssub.s32 %s16, %s23
    %s79 = sor.u32 %s77, %s78
    %p80 = scmp.eq.s32.totalorder %s79, 0
    %s82 = sadd.s32 %s81, 1
    %s83 = scalar_select %p80, %s81, %s82
    %p86 = pneg %p80
    %p87 = scmp.eq.s32.totalorder %s8, 1
    %p88 = por %p86, %p87
    %p89 = scmp.ne.s32.totalorder %s81, %s84
    %p90 = scmp.eq.s32.totalorder %s8, 0
    %p91 = por %p89, %p90
    %p92 = scmp.ne.s32.totalorder %s81, %s84
    %p93 = scmp.eq.s32.totalorder %s13, 1
    %p94 = por %p92, %p93
    %p95 = scmp.ne.s32.totalorder %s84, %s85
    %p96 = scmp.eq.s32.totalorder %s13, 0
    %p97 = por %p95, %p96
    %p98 = scmp.ne.s32.totalorder %s84, %s85
    %p99 = scmp.eq.s32.totalorder %s14, 1
    %p100 = por %p98, %p99
    %p102 = scmp.ne.s32.totalorder %s85, %s101
    %p103 = scmp.eq.s32.totalorder %s14, 0
    %p104 = por %p102, %p103
    %p105 = scmp.le.s32.totalorder 1, %s8
    %p106 = scmp.lt.s32.totalorder %s8, 3
    %p107 = pnand %p105, %p106
    %p108 = pneg %p107
    // Predicated region
    $region9: #{tpu_custom_call.1} parent=5 // pred_check
      _
    $region10: #{tpu_custom_call.1} parent=5 // pred_check_branch
      %110 = sbr.rel (%p107) target = $region12
    $region11: #{tpu_custom_call.1} parent=5 // pred_region
      %s111 = ssub.s32 %s8, 1
      // Predicated region
      $region13: #{tpu_custom_call.1} parent=11 // pred_check
        %p112 = pneg %p69
      $region14: #{tpu_custom_call.1} parent=11 // pred_check_branch
        %114 = sbr.rel (%p112) target = $region16
      $region15: #{tpu_custom_call.1} parent=11 // pred_region
        _
      $region16: #{tpu_custom_call.1} parent=11 // pred_fallthru
        _
    $region12: #{tpu_custom_call.1} parent=5 // pred_fallthru
      _
    %p115 = scmp.lt.s32.totalorder %s8, 2
    // Predicated region
    $region17: #{tpu_custom_call.1} parent=5 // pred_check
      %p116 = pneg %p115
    $region18: #{tpu_custom_call.1} parent=5 // pred_check_branch
      %118 = sbr.rel (%p116) target = $region20
    $region19: #{tpu_custom_call.1} parent=5 // pred_region
      // Predicated region
      $region21: #{tpu_custom_call.1} parent=19 // pred_check
        %p119 = pneg %p42
      $region22: #{tpu_custom_call.1} parent=19 // pred_check_branch
        %121 = sbr.rel (%p119) target = $region24
      $region23: #{tpu_custom_call.1} parent=19 // pred_region
        %p122 = scmp.lt.s32.totalorder %s15, 1
        %s123 = scalar_select %p122, %s15, 1
        %p124 = scmp.lt.s32.totalorder %s16, 0
        %s125 = scalar_select %p124, %s16, 0
        %s126 = smul.addr %s125, 2
        %s127 = smul.addr %s123, 2
        %s128 = sadd.s32 %s126, %s127
        %s129 = smul.addr %s128, 4
        %s130 = scalar_lea.vmem %s0, %s129
      $region24: #{tpu_custom_call.1} parent=19 // pred_fallthru
        _
    $region20: #{tpu_custom_call.1} parent=5 // pred_fallthru
      _
    %p131 = scmp.le.s32.totalorder 1, %s8
    %p132 = scmp.lt.s32.totalorder %s8, 3
    %p133 = pnand %p131, %p132
    %p134 = pneg %p133
    // Predicated region
    $region25: #{tpu_custom_call.1} parent=5 // pred_check
      _
    $region26: #{tpu_custom_call.1} parent=5 // pred_check_branch
      %136 = sbr.rel (%p133) target = $region28
    $region27: #{tpu_custom_call.1} parent=5 // pred_region
      %s137 = ssub.s32 %s8, 1
      %p138 = scmp.lt.s32.totalorder %s17, 1
      %s139 = scalar_select %p138, %s17, 1
      %p140 = scmp.lt.s32.totalorder %s18, 0
      %s141 = scalar_select %p140, %s18, 0
      %s142 = smul.addr %s141, 2
      %s143 = smul.addr %s139, 2
      %s144 = sadd.s32 %s142, %s143
      %s145 = smul.addr %s144, 4
      %s146 = scalar_lea.vmem %s0, %s145
      %p147 = pneg %p48
      %p148 = pneg %p45
      %p149 = pneg %p69
      %p150 = pneg %p66
      %p151 = pneg %p97
      %p152 = pneg %p94
      %p153 = scmp.lt.s32.totalorder %s17, 1
      %s154 = scalar_select %p153, %s17, 1
      %p155 = scmp.lt.s32.totalorder %s18, 0
      %s156 = scalar_select %p155, %s18, 0
      %s157 = sadd.s32 %s156, %s154
      %s158 = smul.addr %s157, 4
      %s159 = scalar_lea.vmem %s2, %s158
      %p160 = scmp.lt.s32.totalorder %s17, 1
      %s161 = scalar_select %p160, %s17, 1
      %p162 = scmp.lt.s32.totalorder %s18, 0
      %s163 = scalar_select %p162, %s18, 0
      %s164 = smul.addr %s163, 2
      %s165 = smul.addr %s161, 2
      %s166 = sadd.s32 %s164, %s165
      %s167 = smul.addr %s166, 4
      %s168 = scalar_lea.vmem %s0, %s167
      %p169 = scmp.lt.s32.totalorder %s17, 1
      %s170 = scalar_select %p169, %s17, 1
      %p171 = scmp.lt.s32.totalorder %s18, 0
      %s172 = scalar_select %p171, %s18, 0
      %s173 = sadd.s32 %s172, %s170
      %s174 = smul.addr %s173, 4
      %s175 = scalar_lea.vmem %s2, %s174
      %v176 = vld [vmem:[%s168] sm:$0xff]
      %178 = vst [vmem:[#allocation1] ss:$2 sm:$0xff] %v176
      %v179 = vld.sshfl [vmem:[#allocation1] sm:$0xff pattern:$0x75316420]
      %v180 = vld.sshfl [vmem:[#allocation1 + $0x8] sm:$0xff pattern:$0x75316420]
      %183 = vrot.lane.b32.xlu0 %v179, 1
      %v184 = vpop.permute.xlu0 %183
      %185 = vrot.lane.b32.xlu0 %v180, 1
      %v186 = vpop.permute.xlu0 %185
      %v187 = vlaneseq
      %v188 = vand.u32 %v187, 127
      %vm189 = vcmp.lt.s32.totalorder %v188, 1
      %v190 = vsel %vm189, %v184, %v186
      %v191 = vsel %vm189, %v186, %v184
      %v194 = vrot.slane %v190, 4
      %vm195 = vcmask 1043456
      %v196 = vsel %vm195, %v191, %v194
      %v198 = vadd.f32 %v176, %v196
      %199 = vst [vmem:[#allocation1] ss:$2 sm:$0xff] %v176
      %v200 = vld.sshfl [vmem:[#allocation1] sm:$0xff pattern:$0x75316420]
      %v201 = vld.sshfl [vmem:[#allocation1 + $0x8] sm:$0xff pattern:$0x75316420]
      %204 = vrot.lane.b32.xlu0 %v200, 127
      %v205 = vpop.permute.xlu0 %204
      %206 = vrot.lane.b32.xlu0 %v201, 127
      %v207 = vpop.permute.xlu0 %206
      %vm208 = vcmp.lt.s32.totalorder %v188, 127
      %v209 = vsel %vm208, %v205, %v207
      %v210 = vsel %vm208, %v207, %v205
      %v213 = vrot.slane %v210, 4
      %v214 = vsel %vm195, %v209, %v213
      %v216 = vadd.f32 %v198, %v214
      %217 = vst [vmem:[#allocation1] ss:$2 sm:$0xff] %v176
      %v218 = vld.sshfl [vmem:[#allocation1] sm:$0xff pattern:$0x75316420]
      %v219 = vld.sshfl [vmem:[#allocation1 + $0x8] sm:$0xff pattern:$0x75316420]
      %222 = vrot.lane.b32.xlu0 %v218, 16
      %v223 = vpop.permute.xlu0 %222
      %224 = vrot.lane.b32.xlu0 %v219, 16
      %v225 = vpop.permute.xlu0 %224
      %vm226 = vcmp.lt.s32.totalorder %v188, 16
      %v227 = vsel %vm226, %v223, %v225
      %v228 = vsel %vm226, %v225, %v223
      %229 = vst [vmem:[#allocation1] ss:$2 sm:$0xff] %v176
      %v230 = vld.sshfl [vmem:[#allocation1] sm:$0xff pattern:$0x75316420]
      %v231 = vld.sshfl [vmem:[#allocation1 + $0x8] sm:$0xff pattern:$0x75316420]
      %234 = vrot.lane.b32.xlu0 %v230, 112
      %v235 = vpop.permute.xlu0 %234
      %236 = vrot.lane.b32.xlu0 %v231, 112
      %v237 = vpop.permute.xlu0 %236
      %vm238 = vcmp.lt.s32.totalorder %v188, 112
      %v239 = vsel %vm238, %v235, %v237
      %v240 = vsel %vm238, %v237, %v235
      %v241 = vadd.f32 %v228, %v239
      %v242 = vadd.f32 %v227, %v240
      %244 = vst [vmem:[#allocation1] ss:$2 sm:$0xff] %v216
      %v245 = vld.sshfl [vmem:[#allocation1] sm:$0xff pattern:$0x75316420]
      %v246 = vld.sshfl [vmem:[#allocation1 + $0x8] sm:$0xff pattern:$0x75316420]
      %249 = vrot.lane.b32.xlu0 %v245, 16
      %v250 = vpop.permute.xlu0 %249
      %251 = vrot.lane.b32.xlu0 %v246, 16
      %v252 = vpop.permute.xlu0 %251
      %v253 = vsel %vm226, %v250, %v252
      %v254 = vsel %vm226, %v252, %v250
      %v257 = vrot.slane %v253, 4
      %v258 = vsel %vm195, %v254, %v257
      %v260 = vadd.f32 %v216, %v258
      %261 = vst [vmem:[#allocation1] ss:$2 sm:$0xff] %v216
      %v262 = vld.sshfl [vmem:[#allocation1] sm:$0xff pattern:$0x75316420]
      %v263 = vld.sshfl [vmem:[#allocation1 + $0x8] sm:$0xff pattern:$0x75316420]
      %266 = vrot.lane.b32.xlu0 %v262, 112
      %v267 = vpop.permute.xlu0 %266
      %268 = vrot.lane.b32.xlu0 %v263, 112
      %v269 = vpop.permute.xlu0 %268
      %v270 = vsel %vm238, %v267, %v269
      %v271 = vsel %vm238, %v269, %v267
      %v274 = vrot.slane %v271, 4
      %v275 = vsel %vm195, %v270, %v274
      %v277 = vadd.f32 %v260, %v275
      %v278 = vsub.f32 %v216, %v176
      %v281 = vrot.slane %v242, 4
      %v282 = vsel %vm195, %v241, %v281
      %v284 = vadd.f32 %v278, %v282
      %v285 = vmul.f32 %v284, 0.375
      %v286 = vmul.f32 %v277, 0.0625
      %v287 = vsub.f32 %v285, %v286
      %v288 = vmul.f32 %v176, 0.9375
      %v289 = vsub.f32 %v287, %v288
      %v290 = vand.u32 2147483647, %v289
      %v291 = vld [vmem:[%s1] sm:$0xff]
      %v292 = vld [vmem:[%s1 + $0x8] sm:$0xff]
      %v293 = vld [vmem:[%s1 + $0x10] sm:$0xff]
      %v294 = vld [vmem:[%s1 + $0x18] sm:$0xff]
      %v295 = vld [vmem:[%s1 + $0x20] sm:$0xff]
      %v296 = vld [vmem:[%s1 + $0x28] sm:$0xff]
      %v297 = vld [vmem:[%s1 + $0x30] sm:$0xff]
      %v298 = vld [vmem:[%s1 + $0x38] sm:$0xff]
      %v299 = vld [vmem:[%s1 + $0x40] sm:$0xff]
      %v300 = vld [vmem:[%s1 + $0x48] sm:$0xff]
      %v301 = vld [vmem:[%s1 + $0x50] sm:$0xff]
      %v302 = vld [vmem:[%s1 + $0x58] sm:$0xff]
      %v303 = vld [vmem:[%s1 + $0x60] sm:$0xff]
      %v304 = vld [vmem:[%s1 + $0x68] sm:$0xff]
      %v305 = vld [vmem:[%s1 + $0x70] sm:$0xff]
      %v306 = vld [vmem:[%s1 + $0x78] sm:$0xff]
      %v307 = vld [vmem:[%s1 + $0x80] sm:$0xff]
      %v308 = vld [vmem:[%s1 + $0x88] sm:$0xff]
      %v309 = vld [vmem:[%s1 + $0x90] sm:$0xff]
      %v310 = vld [vmem:[%s1 + $0x98] sm:$0xff]
      %v311 = vld [vmem:[%s1 + $0xa0] sm:$0xff]
      %v312 = vld [vmem:[%s1 + $0xa8] sm:$0xff]
      %v313 = vld [vmem:[%s1 + $0xb0] sm:$0xff]
      %v314 = vld [vmem:[%s1 + $0xb8] sm:$0xff]
      %v315 = vld [vmem:[%s1 + $0xc0] sm:$0xff]
      %v316 = vld [vmem:[%s1 + $0xc8] sm:$0xff]
      %v317 = vld [vmem:[%s1 + $0xd0] sm:$0xff]
      %v318 = vld [vmem:[%s1 + $0xd8] sm:$0xff]
      %v319 = vld [vmem:[%s1 + $0xe0] sm:$0xff]
      %v320 = vld [vmem:[%s1 + $0xe8] sm:$0xff]
      %v321 = vld [vmem:[%s1 + $0xf0] sm:$0xff]
      %v322 = vld [vmem:[%s1 + $0xf8] sm:$0xff]
      %324 = vst [vmem:[#allocation1] ss:$2 sm:$0xff] %v290
      %v325 = vld.sshfl [vmem:[#allocation1] sm:$0xff pattern:$0x75316420]
      %v326 = vld.sshfl [vmem:[#allocation1 + $0x8] sm:$0xff pattern:$0x75316420]
      %329 = vmatpush.msra.mxu0 %v306
      %330 = vmatpush.msra.mxu0 %v305
      %331 = vmatpush.msra.mxu0 %v304
      %332 = vmatpush.msra.mxu0 %v303
      %333 = vmatpush.msra.mxu0 %v302
      %334 = vmatpush.msra.mxu0 %v301
      %335 = vmatpush.msra.mxu0 %v300
      %336 = vmatpush.msra.mxu0 %v299
      %337 = vmatpush.msra.mxu0 %v298
      %338 = vmatpush.msra.mxu0 %v297
      %339 = vmatpush.msra.mxu0 %v296
      %340 = vmatpush.msra.mxu0 %v295
      %341 = vmatpush.msra.mxu0 %v294
      %342 = vmatpush.msra.mxu0 %v293
      %343 = vmatpush.msra.mxu0 %v292
      %344 = vmatpush.msra.mxu0 %v291
      %345 = vmatmul.f32.gmra.mxu0 %v325
      %v346 = vpop.f32.mrf.mxu0
      %v347 = vadd.f32 0.0, %v346
      %348 = vdwg.mxu0
      %349 = vmatpush.msra.mxu0 %v322
      %350 = vmatpush.msra.mxu0 %v321
      %351 = vmatpush.msra.mxu0 %v320
      %352 = vmatpush.msra.mxu0 %v319
      %353 = vmatpush.msra.mxu0 %v318
      %354 = vmatpush.msra.mxu0 %v317
      %355 = vmatpush.msra.mxu0 %v316
      %356 = vmatpush.msra.mxu0 %v315
      %357 = vmatpush.msra.mxu0 %v314
      %358 = vmatpush.msra.mxu0 %v313
      %359 = vmatpush.msra.mxu0 %v312
      %360 = vmatpush.msra.mxu0 %v311
      %361 = vmatpush.msra.mxu0 %v310
      %362 = vmatpush.msra.mxu0 %v309
      %363 = vmatpush.msra.mxu0 %v308
      %364 = vmatpush.msra.mxu0 %v307
      %365 = vmatmul.f32.gmra.mxu0 %v326
      %v366 = vpop.f32.mrf.mxu0
      %v367 = vadd.f32 %v347, %v366
      %368 = vdwg.mxu0
      %vm369 = vcmask 3072
      %370 = vst.msk [vmem:[%s175] sm:$0xf] %vm369, %v367
      %p371 = scmp.lt.s32.totalorder %s17, 1
      %s372 = scalar_select %p371, %s17, 1
      %p373 = scmp.lt.s32.totalorder %s18, 0
      %s374 = scalar_select %p373, %s18, 0
      %s375 = sadd.s32 %s374, %s372
      %s376 = smul.addr %s375, 4
      %s377 = scalar_lea.vmem %s2, %s376
      // Predicated region
      $region29: #{tpu_custom_call.1} parent=27 // pred_check
        %p378 = pneg %p94
      $region30: #{tpu_custom_call.1} parent=27 // pred_check_branch
        %380 = sbr.rel (%p378) target = $region32
      $region31: #{tpu_custom_call.1} parent=27 // pred_region
        _
      $region32: #{tpu_custom_call.1} parent=27 // pred_fallthru
        _
    $region28: #{tpu_custom_call.1} parent=5 // pred_fallthru
      _
    %p381 = scmp.le.s32.totalorder 2, %s8
    // Predicated region
    $region33: #{tpu_custom_call.1} parent=5 // pred_check
      %p382 = pneg %p381
    $region34: #{tpu_custom_call.1} parent=5 // pred_check_branch
      %384 = sbr.rel (%p382) target = $region36
    $region35: #{tpu_custom_call.1} parent=5 // pred_region
      %s385 = ssub.s32 %s8, 2
      // Predicated region
      $region37: #{tpu_custom_call.1} parent=35 // pred_check
        %p386 = pneg %p100
      $region38: #{tpu_custom_call.1} parent=35 // pred_check_branch
        %388 = sbr.rel (%p386) target = $region40
      $region39: #{tpu_custom_call.1} parent=35 // pred_region
        %p389 = scmp.lt.s32.totalorder %s19, 1
        %s390 = scalar_select %p389, %s19, 1
        %p391 = scmp.lt.s32.totalorder %s20, 0
        %s392 = scalar_select %p391, %s20, 0
        %s393 = sadd.s32 %s392, %s390
        %s394 = smul.addr %s393, 4
        %s395 = scalar_lea.vmem %s2, %s394
      $region40: #{tpu_custom_call.1} parent=35 // pred_fallthru
        _
    $region36: #{tpu_custom_call.1} parent=5 // pred_fallthru
      _
  $region6: #{tpu_custom_call.1} parent=0 // loop_footer
    %s12 = sadd.s32 1, %s8
  $region7: #{tpu_custom_call.1} parent=0 // loop_footer_branch
    %7 = sbr.rel target = $region3
  $region8: #{tpu_custom_call.1} parent=0 // loop_exit
    _

</llo_original>
